<compile_context>
chip_gen: v7x
topology: tpu7x:2x2x1
jax: 0.10.0
libtpu: 0.0.40
codegen_flags: <defaults>
</compile_context>

<pallas_src>
import functools

import jax
import jax.numpy as jnp
from jax import lax
from jax.experimental import pallas as pl
from jax.experimental.pallas import tpu as pltpu

LANE = 128             # TPU lane width (fast axis)
MAX_TILE_ROWS = 2048   # rows per grid step (sweepable: 1024 / 2048 / 4096)
NUM_CORE_SPLITS = 2    # leading "parallel" axis; splits across TCs on v7x


def _bce_elementwise(x, z):
    """Numerically stable BCE with logits (matches PyTorch):
       loss = max(x, 0) - x*z + log1p(exp(-|x|))"""
    x = x.astype(jnp.float32)
    z = z.astype(jnp.float32)
    return jnp.maximum(x, 0.0) - x * z + jnp.log1p(jnp.exp(-jnp.abs(x)))


def _bce_tile_kernel(pred_ref, targ_ref, out_ref, *,
                     rows, block_rows, tiles_per_split, needs_mask):
    """One grid step: BCE on a (block_rows, LANE) tile, row-reduced to the
    resident (acc_rows, LANE) output block of this core split.  Partial /
    out-of-range tiles are masked only when they can exist (static flag) and
    only on the steps that need it (pl.when on a dynamic scalar)."""
    p = pl.program_id(0)   # core split        ("parallel")
    i = pl.program_id(1)   # tile within split ("arbitrary" reduction axis)

    @pl.when(i == 0)
    def _init():
        out_ref[...] = jnp.zeros_like(out_ref)

    loss = _bce_elementwise(pred_ref[...], targ_ref[...])

    def _row_reduce(v):
        # (block_rows, LANE) -> (acc_rows, LANE): sum groups of 8 sublanes.
        # The reshape splits the sublane axis into vreg tiles (layout
        # preserving); the sum over axis 0 is plain vreg-by-vreg VALU adds.
        if block_rows % 8 == 0 and block_rows > 8:
            return v.reshape(block_rows // 8, 8, LANE).sum(axis=0)
        return v

    if needs_mask:
        t = p * tiles_per_split + i        # global tile index
        valid = rows - t * block_rows      # valid rows in this tile (<=0 -> none)

        @pl.when(valid >= block_rows)      # hot path: full tile, no mask
        def _full():
            out_ref[...] += _row_reduce(loss)

        @pl.when(valid < block_rows)       # partial or out-of-range tile only
        def _partial():
            ridx = lax.broadcasted_iota(jnp.int32, loss.shape, 0)
            out_ref[...] += _row_reduce(jnp.where(ridx < valid, loss, 0.0))
    else:
        out_ref[...] += _row_reduce(loss)


def bce_with_logits_loss(predictions, targets):
    """Mean BCE-with-logits over all elements (PyTorch default reduction)."""
    assert predictions.shape == targets.shape
    n = predictions.size
    assert n > 0

    pred_flat = jnp.ravel(predictions)
    targ_flat = jnp.ravel(targets)

    rows = n // LANE            # 128-aligned prefix, in lane rows
    rem = n - rows * LANE       # <=127 leftover elements

    total = jnp.float32(0.0)
    if rem:
        # Tiny lane remainder: fold in with plain JAX (at most 127 elements).
        total = total + jnp.sum(
            _bce_elementwise(pred_flat[rows * LANE:], targ_flat[rows * LANE:]))
    if rows == 0:               # whole input smaller than one lane row
        return total / n

    if rem:
        # TODO(synk): this prefix slice copies rows*128 elements once; a manual
        # make_async_copy path over the raw 1-D arrays would avoid it for huge
        # lane-unaligned inputs.
        pred_flat = pred_flat[: rows * LANE]
        targ_flat = targ_flat[: rows * LANE]
    pred2d = pred_flat.reshape(rows, LANE)   # free bitcast when rem == 0
    targ2d = targ_flat.reshape(rows, LANE)

    # Tile / split geometry (all static Python ints).
    block_rows = MAX_TILE_ROWS if rows > MAX_TILE_ROWS else rows
    num_tiles = pl.cdiv(rows, block_rows)
    num_splits = NUM_CORE_SPLITS if num_tiles >= NUM_CORE_SPLITS else 1
    tiles_per_split = pl.cdiv(num_tiles, num_splits)

    ragged_last = (rows % block_rows) != 0
    padded_grid = (num_splits * tiles_per_split) != num_tiles
    needs_mask = ragged_last or padded_grid

    acc_rows = 8 if (block_rows % 8 == 0) else block_rows

    def in_index_map(p, i):
        t = p * tiles_per_split + i
        # Clamp out-of-range tiles back in bounds; the kernel masks them to 0.
        return (jnp.minimum(t, num_tiles - 1), 0)

    in_spec = pl.BlockSpec((block_rows, LANE), in_index_map)
    out_spec = pl.BlockSpec((acc_rows, LANE), lambda p, i: (p, 0))

    kernel = functools.partial(
        _bce_tile_kernel, rows=rows, block_rows=block_rows,
        tiles_per_split=tiles_per_split, needs_mask=needs_mask)

    n_kernel = rows * LANE
    cost = pl.CostEstimate(
        flops=6 * n_kernel,
        transcendentals=2 * n_kernel,
        bytes_accessed=(n_kernel * (pred2d.dtype.itemsize + targ2d.dtype.itemsize)
                        + num_splits * acc_rows * LANE * 4),
    )

    partials = pl.pallas_call(
        kernel,
        out_shape=jax.ShapeDtypeStruct((num_splits * acc_rows, LANE), jnp.float32),
        grid_spec=pltpu.PrefetchScalarGridSpec(
            num_scalar_prefetch=0,
            grid=(num_splits, tiles_per_split),
            in_specs=[in_spec, in_spec],
            out_specs=out_spec,
        ),
        compiler_params=pltpu.CompilerParams(
            dimension_semantics=("parallel", "arbitrary")),
        cost_estimate=cost,
    )(pred2d, targ2d)

    # Final tiny reduction + mean scale in plain JAX (<= 2*8*128 f32 values).
    total = total + jnp.sum(partials)
    return total / n


def _reference(predictions, targets):
    return jnp.mean(_bce_elementwise(predictions, targets))


if __name__ == "__main__":
    key = jax.random.PRNGKey(0)
    k1, k2, k3, k4, k5, k6 = jax.random.split(key, 6)

    # 1) Segmentation-style logits map, NCHW, f32, lane-aligned total size.
    shape = (2, 4, 16, 16)
    predictions = jax.random.normal(k1, shape, dtype=jnp.float32) * 2.0
    targets = jax.random.bernoulli(k2, p=0.5, shape=shape).astype(jnp.float32)
    loss = jax.block_until_ready(bce_with_logits_loss(predictions, targets))
    ref = _reference(predictions, targets)
    assert jnp.allclose(loss, ref, rtol=1e-5, atol=1e-6), (loss, ref)

    # 2) Ragged total size (lane remainder + full-dim block path) with bf16.
    shape2 = (3, 5, 7, 11)
    pred2 = (jax.random.normal(k3, shape2, dtype=jnp.float32) * 2.0).astype(jnp.bfloat16)
    targ2 = jax.random.bernoulli(k4, p=0.5, shape=shape2).astype(jnp.bfloat16)
    loss2 = jax.block_until_ready(bce_with_logits_loss(pred2, targ2))
    ref2 = _reference(pred2, targ2)
    assert jnp.allclose(loss2, ref2, rtol=1e-5, atol=1e-6), (loss2, ref2)

    # 3) Multi-tile case: exercises the 2-way parallel split, a partial last
    #    block, a clamped out-of-range block, and the lane remainder at once.
    shape3 = (1, 6, 300, 300)
    pred3 = jax.random.normal(k5, shape3, dtype=jnp.float32) * 2.0
    targ3 = jax.random.bernoulli(k6, p=0.5, shape=shape3).astype(jnp.float32)
    loss3 = jax.block_until_ready(bce_with_logits_loss(pred3, targ3))
    ref3 = _reference(pred3, targ3)
    assert jnp.allclose(loss3, ref3, rtol=1e-4, atol=1e-6), (loss3, ref3)

    print("KERNEL_OK")
</pallas_src>

<mosaic_0001>
module attributes {stable_mosaic.version = 11 : i64} {
  func.func @_bce_tile_kernel(%arg0: i32, %arg1: i32, %arg2: memref<16x128xf32, #tpu.memory_space<vmem>>, %arg3: memref<16x128xf32, #tpu.memory_space<vmem>>, %arg4: memref<8x128xf32, #tpu.memory_space<vmem>>) attributes {dimension_semantics = [#tpu.dimension_semantics<parallel>, #tpu.dimension_semantics<arbitrary>], iteration_bounds = array<i64: 1, 1>, scalar_prefetch = 0 : i64, scratch_operands = 0 : i64, tpu.core_type = #tpu.core_type<tc>, window_params = [{transform_indices = @transform_0, window_bounds = array<i64: 16, 128>}, {transform_indices = @transform_1, window_bounds = array<i64: 16, 128>}, {transform_indices = @transform_2, window_bounds = array<i64: 8, 128>}]} {
    %c0_i32 = arith.constant 0 : i32
    %0 = arith.cmpi eq, %arg1, %c0_i32 : i32
    %1 = arith.extui %0 : i1 to i32
    %c0_i32_0 = arith.constant 0 : i32
    %2 = arith.cmpi ne, %1, %c0_i32_0 : i32
    scf.if %2 {
      %cst_10 = arith.constant 0.000000e+00 : f32
      %20 = vector.broadcast %cst_10 : f32 to vector<8x128xf32>
      %c0_11 = arith.constant 0 : index
      %c0_12 = arith.constant 0 : index
      %21 = vector.load %arg4[%c0_11, %c0_12] : memref<8x128xf32, #tpu.memory_space<vmem>>, vector<8x128xf32>
      tpu.vector_store %arg4[%c0_11, %c0_12], %20 {strides = array<i32>} : memref<8x128xf32, #tpu.memory_space<vmem>>, vector<8x128xf32>,
    } else {
    }
    %c0 = arith.constant 0 : index
    %c0_1 = arith.constant 0 : index
    %3 = vector.load %arg2[%c0, %c0_1] : memref<16x128xf32, #tpu.memory_space<vmem>>, vector<16x128xf32>
    %c0_2 = arith.constant 0 : index
    %c0_3 = arith.constant 0 : index
    %4 = vector.load %arg3[%c0_2, %c0_3] : memref<16x128xf32, #tpu.memory_space<vmem>>, vector<16x128xf32>
    %cst = arith.constant 0.000000e+00 : f32
    %5 = vector.broadcast %cst : f32 to vector<16x128xf32>
    %6 = arith.maximumf %3, %5 : vector<16x128xf32>
    %7 = arith.mulf %3, %4 : vector<16x128xf32>
    %8 = arith.subf %6, %7 : vector<16x128xf32>
    %9 = math.absf %3 : vector<16x128xf32>
    %cst_4 = arith.constant 0.000000e+00 : f32
    %10 = vector.broadcast %cst_4 : f32 to vector<16x128xf32>
    %11 = arith.subf %10, %9 : vector<16x128xf32>
    %12 = math.exp %11 : vector<16x128xf32>
    %13 = math.log1p %12 : vector<16x128xf32>
    %14 = arith.addf %8, %13 : vector<16x128xf32>
    %c0_5 = arith.constant 0 : index
    %c0_6 = arith.constant 0 : index
    %15 = vector.load %arg4[%c0_5, %c0_6] : memref<8x128xf32, #tpu.memory_space<vmem>>, vector<8x128xf32>
    %16 = vector.shape_cast %14 : vector<16x128xf32> to vector<2x8x128xf32>
    %cst_7 = arith.constant dense<0.000000e+00> : vector<8x128xf32>
    %17 = vector.multi_reduction <add>, %16, %cst_7 [0] : vector<2x8x128xf32> to vector<8x128xf32>
    %18 = arith.addf %15, %17 : vector<8x128xf32>
    %c0_8 = arith.constant 0 : index
    %c0_9 = arith.constant 0 : index
    %19 = vector.load %arg4[%c0_8, %c0_9] : memref<8x128xf32, #tpu.memory_space<vmem>>, vector<8x128xf32>
    tpu.vector_store %arg4[%c0_8, %c0_9], %18 {strides = array<i32>} : memref<8x128xf32, #tpu.memory_space<vmem>>, vector<8x128xf32>,
    return
  }
  func.func @transform_0(%arg0: i32, %arg1: i32) -> (i32, i32) {
    %c1_i32 = arith.constant 1 : i32
    %0 = arith.muli %arg0, %c1_i32 : i32
    %1 = arith.addi %0, %arg1 : i32
    %c0_i32 = arith.constant 0 : i32
    %2 = arith.minsi %1, %c0_i32 : i32
    %c0_i32_0 = arith.constant 0 : i32
    %c0_i32_1 = arith.constant 0 : i32
    return %2, %c0_i32_0 : i32, i32
  }
  func.func @transform_1(%arg0: i32, %arg1: i32) -> (i32, i32) {
    %c1_i32 = arith.constant 1 : i32
    %0 = arith.muli %arg0, %c1_i32 : i32
    %1 = arith.addi %0, %arg1 : i32
    %c0_i32 = arith.constant 0 : i32
    %2 = arith.minsi %1, %c0_i32 : i32
    %c0_i32_0 = arith.constant 0 : i32
    %c0_i32_1 = arith.constant 0 : i32
    return %2, %c0_i32_0 : i32, i32
  }
  func.func @transform_2(%arg0: i32, %arg1: i32) -> (i32, i32) {
    %c0_i32 = arith.constant 0 : i32
    %c0_i32_0 = arith.constant 0 : i32
    return %arg0, %c0_i32 : i32, i32
  }
}

</mosaic_0001>

<llo_original>
// kernel: tpu_custom_call.1
$region0: #{tpu_custom_call.1}
  #allocation0 [shape = 'u32[]', space=smem, size = 0x4, offset = 0x4, fixed_abs, tag = 'smem constant byte address 0x4 - core index']
  #allocation1 [shape = 'u32[144,128]{1,0:T(1,128)}', space=vmem, size = 0x12000, scoped, tag = 'internal scratch']
  %s0 = inlined_call_operand.hbm [shape: f32[16,128], index: 0, kind: input, shape index: {}]
  %s1 = inlined_call_operand.hbm [shape: f32[16,128], index: 1, kind: input, shape index: {}]
  %s2 = inlined_call_operand.hbm [shape: f32[8,128], index: 2, kind: output, shape index: {}]
  %s3 = sld [smem:[#allocation0]]
  $region30: #{tpu_custom_call.1} parent=0
    _
  %s5 = ssub.s32 1, %s3
  %s6 = scalar_select 0, %s5, %s3
  $region1: #{tpu_custom_call.1} parent=0
    #allocation2 [shape = 'u8[8192]{0}', space=vmem, size = 0x2000, scoped, tag = 'input window, operand 0, single buffered']
    #allocation3 [shape = 's32[1]{0}', space=sflag, size = 0x4, scoped, tag = 'scoped memory for tpu_custom_call.1']
    #allocation4 [shape = 's32[1]{0}', space=sflag, size = 0x4, scoped, tag = 'scoped memory for tpu_custom_call.1']
    #allocation5 [shape = 'u8[8192]{0}', space=vmem, size = 0x2000, scoped, tag = 'input window, operand 1, single buffered']
    #allocation6 [shape = 's32[1]{0}', space=sflag, size = 0x4, scoped, tag = 'scoped memory for tpu_custom_call.1']
    #allocation7 [shape = 'u8[4096]{0}', space=vmem, size = 0x1000, scoped, tag = 'output window, operand 0, single buffered']
    %7 = vsyncpa [#allocation3], 0
    %8 = vsyncpa [#allocation6], 0
    %9 = vsyncpa [#allocation4], 0
    // Predicated region
    $region2: #{tpu_custom_call.1} parent=1 // pred_check
      _
    $region3: #{tpu_custom_call.1} parent=1 // pred_check_branch
      %11 = sbr.rel (0) target = $region5
    $region4: #{tpu_custom_call.1} parent=1 // pred_region
      %s12 = sadd.s32 0, 0
      %p13 = scmp.lt.s32.totalorder %s12, 0
      %s14 = scalar_select %p13, %s12, 0
      %s15 = smul.u32 2, %s14
      %s17 = ssub.s32 256, 256
      %18 = vsyncadd [#allocation3], %s17
      %s19 = smul.addr %s15, 128
      %s20 = scalar_lea.hbm %s0, %s19
      %s21 = sshll.u32 [#allocation2], 4
      %s22 = int_to_ptr.vmem [resolvable:$true] %s21
      %27 = dma.hbm_to_vmem [thread:$0]  %s20, 256, %s22, [#allocation3], 128, 128, 8
    $region5: #{tpu_custom_call.1} parent=1 // pred_fallthru
      _
    // Predicated region
    $region6: #{tpu_custom_call.1} parent=1 // pred_check
      _
    $region7: #{tpu_custom_call.1} parent=1 // pred_check_branch
      %29 = sbr.rel (0) target = $region9
    $region8: #{tpu_custom_call.1} parent=1 // pred_region
      %s30 = sadd.s32 0, 0
      %p31 = scmp.lt.s32.totalorder %s30, 0
      %s32 = scalar_select %p31, %s30, 0
      %s33 = smul.u32 2, %s32
      %s35 = ssub.s32 256, 256
      %36 = vsyncadd [#allocation6], %s35
      %s37 = smul.addr %s33, 128
      %s38 = scalar_lea.hbm %s1, %s37
      %s39 = sshll.u32 [#allocation5], 4
      %s40 = int_to_ptr.vmem [resolvable:$true] %s39
      %45 = dma.hbm_to_vmem [thread:$0]  %s38, 256, %s40, [#allocation6], 128, 128, 8
    $region9: #{tpu_custom_call.1} parent=1 // pred_fallthru
      _
    // Predicated region
    $region10: #{tpu_custom_call.1} parent=1 // pred_check
      _
    $region11: #{tpu_custom_call.1} parent=1 // pred_check_branch
      %47 = sbr.rel (0) target = $region13
    $region12: #{tpu_custom_call.1} parent=1 // pred_region
      %48 = dma.done [#allocation3], 256
    $region13: #{tpu_custom_call.1} parent=1 // pred_fallthru
      _
    // Predicated region
    $region14: #{tpu_custom_call.1} parent=1 // pred_check
      _
    $region15: #{tpu_custom_call.1} parent=1 // pred_check_branch
      %50 = sbr.rel (0) target = $region17
    $region16: #{tpu_custom_call.1} parent=1 // pred_region
      %51 = dma.done [#allocation6], 256
    $region17: #{tpu_custom_call.1} parent=1 // pred_fallthru
      _
    %s52 = sadd.s32 0, 0
    %p53 = scmp.lt.s32.totalorder %s52, 0
    %s54 = scalar_select %p53, %s52, 0
    %s55 = smul.u32 2, %s54
    %s56 = sadd.s32 0, 0
    %p57 = scmp.lt.s32.totalorder %s56, 0
    %s58 = scalar_select %p57, %s56, 0
    %s59 = smul.u32 2, %s58
    %p60 = scmp.eq.s32.totalorder 0, 0
    // Predicated region
    $region18: #{tpu_custom_call.1} parent=1 // pred_check
      %p61 = pneg %p60
    $region19: #{tpu_custom_call.1} parent=1 // pred_check_branch
      %63 = sbr.rel (%p61) target = $region21
    $region20: #{tpu_custom_call.1} parent=1 // pred_region
      %64 = vst [vmem:[#allocation7] sm:$0xff] 0.0
    $region21: #{tpu_custom_call.1} parent=1 // pred_fallthru
      _
    %v65 = vld [vmem:[#allocation2] sm:$0xff]
    %v66 = vld [vmem:[#allocation2 + $0x8] sm:$0xff]
    %v67 = vld [vmem:[#allocation5] sm:$0xff]
    %v68 = vld [vmem:[#allocation5 + $0x8] sm:$0xff]
    %v69 = vmax.f32 %v65, 0.0
    %v70 = vmax.f32 %v66, 0.0
    %v71 = vmul.f32 %v65, %v67
    %v72 = vmul.f32 %v66, %v68
    %v73 = vsub.f32 %v69, %v71
    %v74 = vsub.f32 %v70, %v72
    %v75 = vand.u32 2147483647, %v65
    %v76 = vand.u32 2147483647, %v66
    %v77 = vsub.f32 0.0, %v75
    %v78 = vsub.f32 0.0, %v76
    %v79 = vmul.f32 %v77, 1.442695
    %v80 = vpow.pop %v79
    %v81 = vmul.f32 %v78, 1.442695
    %v82 = vpow.pop %v81
    %v83 = vadd.f32 %v80, 1.0
    %v84 = vlog2.pop %v83
    %v85 = vmul.f32 %v84, 0.6931472
    %v86 = vmul.f32 -0.5, %v80
    %v87 = vadd.f32 %v86, 1.0
    %v88 = vmul.f32 %v87, %v80
    %v89 = vand.u32 2147483647, %v80
    %vm90 = vcmp.lt.f32.partialorder %v89, 0.0004427343
    %v91 = vsel %vm90, %v88, %v85
    %v92 = vadd.f32 %v82, 1.0
    %v93 = vlog2.pop %v92
    %v94 = vmul.f32 %v93, 0.6931472
    %v95 = vmul.f32 -0.5, %v82
    %v96 = vadd.f32 %v95, 1.0
    %v97 = vmul.f32 %v96, %v82
    %v98 = vand.u32 2147483647, %v82
    %vm99 = vcmp.lt.f32.partialorder %v98, 0.0004427343
    %v100 = vsel %vm99, %v97, %v94
    %v101 = vadd.f32 %v73, %v91
    %v102 = vadd.f32 %v74, %v100
    %v103 = vld [vmem:[#allocation7] sm:$0xff]
    %v104 = vadd.f32 %v101, %v102
    %v105 = vadd.f32 %v103, %v104
    %106 = vst [vmem:[#allocation7] sm:$0xff] %v105
    // Predicated region
    $region22: #{tpu_custom_call.1} parent=1 // pred_check
      _
    $region23: #{tpu_custom_call.1} parent=1 // pred_check_branch
      %108 = sbr.rel (0) target = $region25
    $region24: #{tpu_custom_call.1} parent=1 // pred_region
      %s110 = ssub.s32 128, 128
      %111 = vsyncadd [#allocation4], %s110
      %s113 = sshll.u32 [#allocation7], 4
      %s114 = int_to_ptr.vmem [resolvable:$true] %s113
      %116 = dma.vmem_to_hbm [thread:$0]  %s114, 128, %s2, [#allocation4]
    $region25: #{tpu_custom_call.1} parent=1 // pred_fallthru
      _
    // Predicated region
    $region26: #{tpu_custom_call.1} parent=1 // pred_check
      _
    $region27: #{tpu_custom_call.1} parent=1 // pred_check_branch
      %118 = sbr.rel (0) target = $region29
    $region28: #{tpu_custom_call.1} parent=1 // pred_region
      %119 = dma.done [#allocation4], 128
    $region29: #{tpu_custom_call.1} parent=1 // pred_fallthru
      _
    %120 = vsyncpa [#allocation3], 1
    %121 = vsyncpa [#allocation6], 1
    %122 = vsyncpa [#allocation4], 1

</llo_original>
